<compile_context>
chip_gen: v6e
topology: v6e:2x2x1
jax: 0.10.0
libtpu: 0.0.40
codegen_flags: <defaults>
</compile_context>

<pallas_src>
import jax
import jax.numpy as jnp
from jax.experimental import pallas as pl
from jax.experimental.pallas import tpu as pltpu

HIDDEN = 50        # logical hidden width of the PyTorch module
H_PAD = 64         # padded hidden width (clean sublane multiple; row 50 = bias unit)
LANE = 128         # TPU lane width


def mu_kernel(x_ref, w1_ref, b1_ref, w2_ref, w3_ref, b3_ref, o_ref):
    # Feature-major, batch-on-lanes layout: x_ref is (1, TB) f32.
    x = x_ref[...]                                                   # (1, TB)

    # Layer 1: Linear(1, 50) + ReLU.  K=1 matmul == outer product -> VPU
    # broadcast multiply-add.  Row 50 of b1 is 1.0 so h1 row 50 == 1 (carries
    # b2 into the layer-2 contraction).
    # (If Mosaic ever materializes this sublane broadcast, a stride-0 read of
    #  x via pl.ds(0, H_PAD, stride=0) would push it into the vld instead.)
    h1 = jnp.maximum(w1_ref[...] * x + b1_ref[...], 0.0)             # (H_PAD, TB) f32

    # Layer 2: Linear(50, 50) + ReLU on the MXU.  bf16 operands, f32
    # accumulation.  b2 is folded into w2 (column 50 x constant-1 row of h1),
    # so no separate bias add.  Padded rows/cols are zero -> contribute nothing.
    h2 = jnp.dot(w2_ref[...], h1.astype(jnp.bfloat16),
                 preferred_element_type=jnp.float32)                 # (H_PAD, TB) f32
    h2 = jnp.maximum(h2, 0.0)

    # Layer 3: Linear(50, 1).  out_features=1 matmul == weighted sum over the
    # hidden axis: multiply + cross-sublane reduce (XLU); output stays (1, TB)
    # lane-dense.
    o_ref[...] = jnp.sum(w3_ref[...] * h2, axis=0, keepdims=True) + b3_ref[...]


def mu_forward(v, padded_params, *, tile_b=8192):
    """v: (N, 1) float32.  padded_params from prepare_params().  Returns (N, 1)."""
    N = v.shape[0]

    # Tile must be a multiple of the lane width (hard (8,128) constraint on the
    # (1, tb) blocks) -- enforce it instead of assuming it.
    tb_req = max(LANE, pl.cdiv(int(tile_b), LANE) * LANE)

    # Pad the batch to a whole number of lanes.
    n_pad = max(LANE, pl.cdiv(N, LANE) * LANE)
    tb = min(tb_req, n_pad)

    # v7x megacore: once the batch is big enough, make sure there are at least
    # two grid blocks so dimension_semantics=("parallel",) can use both TCs.
    # (No-op on v5e/v6e which have a single TensorCore.)
    if n_pad >= 2 * 4096:
        half = pl.cdiv(n_pad // 2, LANE) * LANE
        tb = min(tb, half)

    n_pad = pl.cdiv(n_pad, tb) * tb
    n_blocks = n_pad // tb

    # Lane-dense input slab.
    # TODO(synk): for latency-critical small-N calls, pass N via scalar
    # prefetch and mask the tail store instead of this pad + final slice.
    x = jnp.zeros((1, n_pad), jnp.float32).at[0, :N].set(v[:, 0])

    w1, b1, w2, w3, b3 = padded_params
    full = lambda a: pl.BlockSpec(a.shape, lambda i: (0, 0))

    cost = pl.CostEstimate(
        flops=2 * H_PAD * H_PAD * n_pad + 4 * H_PAD * n_pad,
        transcendentals=0,
        bytes_accessed=8 * n_pad
        + 4 * (w1.size + b1.size + w3.size + b3.size)
        + 2 * w2.size,
    )

    out = pl.pallas_call(
        mu_kernel,
        out_shape=jax.ShapeDtypeStruct((1, n_pad), jnp.float32),
        grid_spec=pltpu.PrefetchScalarGridSpec(
            num_scalar_prefetch=0,
            grid=(n_blocks,),
            in_specs=[
                pl.BlockSpec((1, tb), lambda i: (0, i)),   # x tile, lane-dense
                full(w1), full(b1),                        # Linear(1, 50) (+ bias unit)
                full(w2),                                  # Linear(50, 50) w/ b2 folded, bf16
                full(w3), full(b3),                        # Linear(50, 1)
            ],
            out_specs=pl.BlockSpec((1, tb), lambda i: (0, i)),
        ),
        compiler_params=pltpu.CompilerParams(
            dimension_semantics=("parallel",),             # v7x: shard blocks across both TCs
        ),
        cost_estimate=cost,
    )(x, w1, b1, w2, w3, b3)

    return out[0, :N].reshape(N, 1)


def init_params(key):
    """Deterministic init, PyTorch-Linear-style uniform(-1/sqrt(fan_in), ...).
    Weights are produced in PyTorch (out_features, in_features) layout."""
    ks = jax.random.split(key, 6)

    def lin(kw, kb, fan_in, fan_out):
        bound = 1.0 / jnp.sqrt(jnp.float32(fan_in))
        w = jax.random.uniform(kw, (fan_out, fan_in), jnp.float32, -bound, bound)
        b = jax.random.uniform(kb, (fan_out,), jnp.float32, -bound, bound)
        return w, b

    w1, b1 = lin(ks[0], ks[1], 1, HIDDEN)
    w2, b2 = lin(ks[2], ks[3], HIDDEN, HIDDEN)
    w3, b3 = lin(ks[4], ks[5], HIDDEN, 1)
    return dict(w1=w1, b1=b1, w2=w2, b2=b2, w3=w3, b3=b3)


def prepare_params(p):
    """Zero-pad HIDDEN=50 -> 64, lay out weights feature-major, fold b2 into w2
    via a constant-1 hidden unit (row 50), and pre-cast w2 to bf16 for the MXU.
    The zero padding is exact through ReLU and the final reduce."""
    w1 = jnp.zeros((H_PAD, 1), jnp.float32).at[:HIDDEN, :].set(p["w1"])            # (50,1)
    b1 = jnp.zeros((H_PAD, 1), jnp.float32).at[:HIDDEN, 0].set(p["b1"])
    b1 = b1.at[HIDDEN, 0].set(1.0)                        # hidden row 50 == constant 1
    w2 = jnp.zeros((H_PAD, H_PAD), jnp.float32).at[:HIDDEN, :HIDDEN].set(p["w2"])  # (50,50)
    w2 = w2.at[:HIDDEN, HIDDEN].set(p["b2"])              # b2 rides on the constant-1 row
    w2 = w2.astype(jnp.bfloat16)                          # bf16 operands, f32 accumulate
    w3 = jnp.zeros((H_PAD, 1), jnp.float32).at[:HIDDEN, 0].set(p["w3"][0])         # (1,50)
    b3 = p["b3"].reshape(1, 1).astype(jnp.float32)
    return (w1, b1, w2, w3, b3)


def mu_reference(v, p):
    """Pure-JAX f32 reference matching the PyTorch forward (y = x @ W.T + b)."""
    hp = jax.lax.Precision.HIGHEST
    h1 = jnp.maximum(jnp.dot(v, p["w1"].T, precision=hp) + p["b1"], 0.0)
    h2 = jnp.maximum(jnp.dot(h1, p["w2"].T, precision=hp) + p["b2"], 0.0)
    return jnp.dot(h2, p["w3"].T, precision=hp) + p["b3"]


def mu_reference_kernel_precision(v, p):
    """Reference that mimics the kernel's numerics exactly: f32 layer 1/3,
    bf16-operand / f32-accumulate layer 2."""
    h1 = jnp.maximum(v * p["w1"][:, 0][None, :] + p["b1"][None, :], 0.0)   # (N,50) f32
    h2 = jnp.dot(h1.astype(jnp.bfloat16), p["w2"].astype(jnp.bfloat16).T,
                 preferred_element_type=jnp.float32)
    h2 = jnp.maximum(h2 + p["b2"].astype(jnp.bfloat16).astype(jnp.float32), 0.0)
    return jnp.sum(h2 * p["w3"][0][None, :], axis=1, keepdims=True) + p["b3"]


if __name__ == "__main__":
    key = jax.random.PRNGKey(0)
    k_param, k_input = jax.random.split(key)

    params = init_params(k_param)
    padded = prepare_params(params)

    # Small batch of scalar rho_t values (column vector, as the module expects).
    N = 64
    v = jax.random.uniform(k_input, (N, 1), jnp.float32)   # rho in [0, 1)

    out = mu_forward(v, padded)                             # single lane-dense block
    out = jax.block_until_ready(out)
    assert out.shape == (N, 1)

    # Semantic check vs the f32 PyTorch-equivalent forward (layer 2 runs in
    # bf16 on the MXU, so the tolerance is relaxed accordingly).
    ref_f32 = mu_reference(v, params)
    assert jnp.allclose(out, ref_f32, atol=5e-2, rtol=5e-2), "mismatch vs f32 reference"

    # Tight check vs a reference that matches the kernel's mixed precision --
    # validates padding, the b2 fold, and the layout plumbing exactly.
    ref_kp = mu_reference_kernel_precision(v, params)
    assert jnp.allclose(out, ref_kp, atol=1e-4, rtol=1e-4), "mismatch vs kernel-precision ref"

    # Second shape to exercise the lane-padding path (N not a multiple of 128).
    N2 = 300
    v2 = jax.random.uniform(jax.random.PRNGKey(7), (N2, 1), jnp.float32)
    out2 = jax.block_until_ready(mu_forward(v2, padded))
    assert out2.shape == (N2, 1)
    assert jnp.allclose(out2, mu_reference(v2, params), atol=5e-2, rtol=5e-2)

    print("KERNEL_OK")
</pallas_src>

<mosaic_0001>
module attributes {stable_mosaic.version = 11 : i64} {
  func.func @mu_kernel(%arg0: i32, %arg1: memref<1x128xf32, #tpu.memory_space<vmem>>, %arg2: memref<64x1xf32, #tpu.memory_space<vmem>>, %arg3: memref<64x1xf32, #tpu.memory_space<vmem>>, %arg4: memref<64x64xbf16, #tpu.memory_space<vmem>>, %arg5: memref<64x1xf32, #tpu.memory_space<vmem>>, %arg6: memref<1x1xf32, #tpu.memory_space<vmem>>, %arg7: memref<1x128xf32, #tpu.memory_space<vmem>>) attributes {dimension_semantics = [#tpu.dimension_semantics<parallel>], iteration_bounds = array<i64: 1>, scalar_prefetch = 0 : i64, scratch_operands = 0 : i64, tpu.core_type = #tpu.core_type<tc>, window_params = [{transform_indices = @transform_0, window_bounds = array<i64: 1, 128>}, {pipeline_mode = #tpu.pipeline_mode<synchronous>, transform_indices = @transform_1, window_bounds = array<i64: 64, 1>}, {pipeline_mode = #tpu.pipeline_mode<synchronous>, transform_indices = @transform_2, window_bounds = array<i64: 64, 1>}, {pipeline_mode = #tpu.pipeline_mode<synchronous>, transform_indices = @transform_3, window_bounds = array<i64: 64, 64>}, {pipeline_mode = #tpu.pipeline_mode<synchronous>, transform_indices = @transform_4, window_bounds = array<i64: 64, 1>}, {pipeline_mode = #tpu.pipeline_mode<synchronous>, transform_indices = @transform_5, window_bounds = array<i64: 1, 1>}, {transform_indices = @transform_6, window_bounds = array<i64: 1, 128>}]} {
    %c0 = arith.constant 0 : index
    %c0_0 = arith.constant 0 : index
    %0 = vector.load %arg1[%c0, %c0_0] : memref<1x128xf32, #tpu.memory_space<vmem>>, vector<1x128xf32>
    %c0_1 = arith.constant 0 : index
    %c0_2 = arith.constant 0 : index
    %1 = vector.load %arg2[%c0_1, %c0_2] : memref<64x1xf32, #tpu.memory_space<vmem>>, vector<64x1xf32>
    %2 = vector.broadcast %1 : vector<64x1xf32> to vector<64x128xf32>
    %3 = vector.broadcast %0 : vector<1x128xf32> to vector<64x128xf32>
    %4 = arith.mulf %2, %3 : vector<64x128xf32>
    %c0_3 = arith.constant 0 : index
    %c0_4 = arith.constant 0 : index
    %5 = vector.load %arg3[%c0_3, %c0_4] : memref<64x1xf32, #tpu.memory_space<vmem>>, vector<64x1xf32>
    %6 = vector.broadcast %5 : vector<64x1xf32> to vector<64x128xf32>
    %7 = arith.addf %4, %6 : vector<64x128xf32>
    %cst = arith.constant 0.000000e+00 : f32
    %8 = vector.broadcast %cst : f32 to vector<64x128xf32>
    %9 = arith.maximumf %7, %8 : vector<64x128xf32>
    %c0_5 = arith.constant 0 : index
    %c0_6 = arith.constant 0 : index
    %10 = vector.load %arg4[%c0_5, %c0_6] : memref<64x64xbf16, #tpu.memory_space<vmem>>, vector<64x64xbf16>
    %11 = arith.truncf %9 : vector<64x128xf32> to vector<64x128xbf16>
    %cst_7 = arith.constant dense<0.000000e+00> : vector<64x128xf32>
    %12 = tpu.matmul %10, %11, %cst_7 {dimension_numbers = #tpu.dot_dimension_numbers<[1], [0], [0], [1], [0, 0, 1, 1], [], []>} : vector<64x64xbf16>, vector<64x128xbf16>, vector<64x128xf32> -> vector<64x128xf32>
    %cst_8 = arith.constant 0.000000e+00 : f32
    %13 = vector.broadcast %cst_8 : f32 to vector<64x128xf32>
    %14 = arith.maximumf %12, %13 : vector<64x128xf32>
    %c0_9 = arith.constant 0 : index
    %c0_10 = arith.constant 0 : index
    %15 = vector.load %arg5[%c0_9, %c0_10] : memref<64x1xf32, #tpu.memory_space<vmem>>, vector<64x1xf32>
    %16 = vector.broadcast %15 : vector<64x1xf32> to vector<64x128xf32>
    %17 = arith.mulf %16, %14 : vector<64x128xf32>
    %cst_11 = arith.constant dense<0.000000e+00> : vector<128xf32>
    %18 = vector.multi_reduction <add>, %17, %cst_11 [0] : vector<64x128xf32> to vector<128xf32>
    %19 = vector.shape_cast %18 : vector<128xf32> to vector<1x128xf32>
    %c0_12 = arith.constant 0 : index
    %c0_13 = arith.constant 0 : index
    %20 = vector.load %arg6[%c0_12, %c0_13] : memref<1x1xf32, #tpu.memory_space<vmem>>, vector<1x1xf32>
    %21 = vector.broadcast %20 : vector<1x1xf32> to vector<1x128xf32>
    %22 = arith.addf %19, %21 : vector<1x128xf32>
    %c0_14 = arith.constant 0 : index
    %c0_15 = arith.constant 0 : index
    %23 = vector.load %arg7[%c0_14, %c0_15] : memref<1x128xf32, #tpu.memory_space<vmem>>, vector<1x128xf32>
    tpu.vector_store %arg7[%c0_14, %c0_15], %22 {strides = array<i32>} : memref<1x128xf32, #tpu.memory_space<vmem>>, vector<1x128xf32>,
    return
  }
  func.func @transform_0(%arg0: i32) -> (i32, i32) {
    %c0_i32 = arith.constant 0 : i32
    %c0_i32_0 = arith.constant 0 : i32
    return %c0_i32, %arg0 : i32, i32
  }
  func.func @transform_1(%arg0: i32) -> (i32, i32) {
    %c0_i32 = arith.constant 0 : i32
    %c0_i32_0 = arith.constant 0 : i32
    %c0_i32_1 = arith.constant 0 : i32
    return %c0_i32, %c0_i32_0 : i32, i32
  }
  func.func @transform_2(%arg0: i32) -> (i32, i32) {
    %c0_i32 = arith.constant 0 : i32
    %c0_i32_0 = arith.constant 0 : i32
    %c0_i32_1 = arith.constant 0 : i32
    return %c0_i32, %c0_i32_0 : i32, i32
  }
  func.func @transform_3(%arg0: i32) -> (i32, i32) {
    %c0_i32 = arith.constant 0 : i32
    %c0_i32_0 = arith.constant 0 : i32
    %c0_i32_1 = arith.constant 0 : i32
    return %c0_i32, %c0_i32_0 : i32, i32
  }
  func.func @transform_4(%arg0: i32) -> (i32, i32) {
    %c0_i32 = arith.constant 0 : i32
    %c0_i32_0 = arith.constant 0 : i32
    %c0_i32_1 = arith.constant 0 : i32
    return %c0_i32, %c0_i32_0 : i32, i32
  }
  func.func @transform_5(%arg0: i32) -> (i32, i32) {
    %c0_i32 = arith.constant 0 : i32
    %c0_i32_0 = arith.constant 0 : i32
    %c0_i32_1 = arith.constant 0 : i32
    return %c0_i32, %c0_i32_0 : i32, i32
  }
  func.func @transform_6(%arg0: i32) -> (i32, i32) {
    %c0_i32 = arith.constant 0 : i32
    %c0_i32_0 = arith.constant 0 : i32
    return %c0_i32, %arg0 : i32, i32
  }
}

</mosaic_0001>

<llo_original>
// kernel: tpu_custom_call.1
$region0: #{tpu_custom_call.1}
  #allocation0 [shape = 'u32[]', space=smem, size = 0x4, offset = 0x4, fixed_abs, tag = 'smem constant byte address 0x4 - core index']
  #allocation1 [shape = 'u32[144,128]{1,0:T(1,128)}', space=vmem, size = 0x12000, scoped, tag = 'internal scratch']
  #allocation2 [shape = 'f32[1,1]{1,0:T(1,128)S(1)}', space=vmem, size = 0x200, scoped, tag = 'scoped memory for tpu_custom_call.1']
  %s0 = inlined_call_operand.vmem [shape: f32[1,128], index: 0, kind: input, shape index: {}]
  %s1 = inlined_call_operand.vmem [shape: f32[64,1], index: 1, kind: input, shape index: {}]
  %s2 = inlined_call_operand.vmem [shape: f32[64,1], index: 2, kind: input, shape index: {}]
  %s3 = inlined_call_operand.vmem [shape: bf16[64,64], index: 3, kind: input, shape index: {}]
  %s4 = inlined_call_operand.vmem [shape: f32[64,1], index: 4, kind: input, shape index: {}]
  %s5 = inlined_call_operand.<no memory space> [shape: f32[1,1], index: 5, kind: input, shape index: {}]
  %s6 = inlined_call_operand.hbm [shape: f32[1,128], index: 6, kind: output, shape index: {}]
  %s7 = sld [smem:[#allocation0]]
  $region34: #{tpu_custom_call.1} parent=0
    _
  %s9 = ssub.s32 1, %s7
  %s10 = scalar_select 0, %s9, %s7
  %v11 = vstv %s5
  %12 = vst [vmem:[#allocation2] sm:$0x1] %v11
  $region1: #{tpu_custom_call.1} parent=0
    #allocation3 [shape = 'u8[512]{0}', space=vmem, size = 0x400, scoped, tag = 'output window, operand 0, single buffered']
    #allocation4 [shape = 's32[1]{0}', space=sflag, size = 0x4, scoped, tag = 'scoped memory for tpu_custom_call.1']
    %13 = vsyncpa [#allocation4], 0
    // Predicated region
    $region2: #{tpu_custom_call.1} parent=1 // pred_check
      _
    $region3: #{tpu_custom_call.1} parent=1 // pred_check_branch
      %15 = sbr.rel (0) target = $region5
    $region4: #{tpu_custom_call.1} parent=1 // pred_region
      _
    $region5: #{tpu_custom_call.1} parent=1 // pred_fallthru
      _
    // Predicated region
    $region6: #{tpu_custom_call.1} parent=1 // pred_check
      _
    $region7: #{tpu_custom_call.1} parent=1 // pred_check_branch
      %17 = sbr.rel (0) target = $region9
    $region8: #{tpu_custom_call.1} parent=1 // pred_region
      _
    $region9: #{tpu_custom_call.1} parent=1 // pred_fallthru
      _
    // Predicated region
    $region10: #{tpu_custom_call.1} parent=1 // pred_check
      _
    $region11: #{tpu_custom_call.1} parent=1 // pred_check_branch
      %19 = sbr.rel (0) target = $region13
    $region12: #{tpu_custom_call.1} parent=1 // pred_region
      _
    $region13: #{tpu_custom_call.1} parent=1 // pred_fallthru
      _
    // Predicated region
    $region14: #{tpu_custom_call.1} parent=1 // pred_check
      _
    $region15: #{tpu_custom_call.1} parent=1 // pred_check_branch
      %21 = sbr.rel (0) target = $region17
    $region16: #{tpu_custom_call.1} parent=1 // pred_region
      _
    $region17: #{tpu_custom_call.1} parent=1 // pred_fallthru
      _
    // Predicated region
    $region18: #{tpu_custom_call.1} parent=1 // pred_check
      _
    $region19: #{tpu_custom_call.1} parent=1 // pred_check_branch
      %23 = sbr.rel (0) target = $region21
    $region20: #{tpu_custom_call.1} parent=1 // pred_region
      _
    $region21: #{tpu_custom_call.1} parent=1 // pred_fallthru
      _
    // Predicated region
    $region22: #{tpu_custom_call.1} parent=1 // pred_check
      _
    $region23: #{tpu_custom_call.1} parent=1 // pred_check_branch
      %25 = sbr.rel (0) target = $region25
    $region24: #{tpu_custom_call.1} parent=1 // pred_region
      _
    $region25: #{tpu_custom_call.1} parent=1 // pred_fallthru
      _
    %v27 = vld [vmem:[%s0] sm:$0x1]
    %v28 = vld [vmem:[%s1] sm:$0xff]
    %v29 = vld [vmem:[%s1 + $0x8] sm:$0xff]
    %v30 = vld [vmem:[%s1 + $0x10] sm:$0xff]
    %v31 = vld [vmem:[%s1 + $0x18] sm:$0xff]
    %v32 = vld [vmem:[%s1 + $0x20] sm:$0xff]
    %v33 = vld [vmem:[%s1 + $0x28] sm:$0xff]
    %v34 = vld [vmem:[%s1 + $0x30] sm:$0xff]
    %v35 = vld [vmem:[%s1 + $0x38] sm:$0xff]
    %37 = vset.pattern.permute.xlu0 0
    %38 = vperm.xlu0 %37, %v28
    %v39 = vpop.permute.xlu0 %38
    %42 = vset.pattern.permute.xlu0 0
    %43 = vperm.xlu0 %42, %v29
    %v44 = vpop.permute.xlu0 %43
    %47 = vset.pattern.permute.xlu0 0
    %48 = vperm.xlu0 %47, %v30
    %v49 = vpop.permute.xlu0 %48
    %52 = vset.pattern.permute.xlu0 0
    %53 = vperm.xlu0 %52, %v31
    %v54 = vpop.permute.xlu0 %53
    %57 = vset.pattern.permute.xlu0 0
    %58 = vperm.xlu0 %57, %v32
    %v59 = vpop.permute.xlu0 %58
    %62 = vset.pattern.permute.xlu0 0
    %63 = vperm.xlu0 %62, %v33
    %v64 = vpop.permute.xlu0 %63
    %67 = vset.pattern.permute.xlu0 0
    %68 = vperm.xlu0 %67, %v34
    %v69 = vpop.permute.xlu0 %68
    %72 = vset.pattern.permute.xlu0 0
    %73 = vperm.xlu0 %72, %v35
    %v74 = vpop.permute.xlu0 %73
    %v77 = vlaneseq
    %v78 = vshrl.u32 %v77, 7
    %v79 = vsub.s32 0, %v78
    %v80 = vrot.slane %v27, %v79
    %v82 = vmul.f32 %v39, %v80
    %v83 = vmul.f32 %v44, %v80
    %v84 = vmul.f32 %v49, %v80
    %v85 = vmul.f32 %v54, %v80
    %v86 = vmul.f32 %v59, %v80
    %v87 = vmul.f32 %v64, %v80
    %v88 = vmul.f32 %v69, %v80
    %v89 = vmul.f32 %v74, %v80
    %v90 = vld [vmem:[%s2] sm:$0xff]
    %v91 = vld [vmem:[%s2 + $0x8] sm:$0xff]
    %v92 = vld [vmem:[%s2 + $0x10] sm:$0xff]
    %v93 = vld [vmem:[%s2 + $0x18] sm:$0xff]
    %v94 = vld [vmem:[%s2 + $0x20] sm:$0xff]
    %v95 = vld [vmem:[%s2 + $0x28] sm:$0xff]
    %v96 = vld [vmem:[%s2 + $0x30] sm:$0xff]
    %v97 = vld [vmem:[%s2 + $0x38] sm:$0xff]
    %99 = vset.pattern.permute.xlu0 0
    %100 = vperm.xlu0 %99, %v90
    %v101 = vpop.permute.xlu0 %100
    %104 = vset.pattern.permute.xlu0 0
    %105 = vperm.xlu0 %104, %v91
    %v106 = vpop.permute.xlu0 %105
    %109 = vset.pattern.permute.xlu0 0
    %110 = vperm.xlu0 %109, %v92
    %v111 = vpop.permute.xlu0 %110
    %114 = vset.pattern.permute.xlu0 0
    %115 = vperm.xlu0 %114, %v93
    %v116 = vpop.permute.xlu0 %115
    %119 = vset.pattern.permute.xlu0 0
    %120 = vperm.xlu0 %119, %v94
    %v121 = vpop.permute.xlu0 %120
    %124 = vset.pattern.permute.xlu0 0
    %125 = vperm.xlu0 %124, %v95
    %v126 = vpop.permute.xlu0 %125
    %129 = vset.pattern.permute.xlu0 0
    %130 = vperm.xlu0 %129, %v96
    %v131 = vpop.permute.xlu0 %130
    %134 = vset.pattern.permute.xlu0 0
    %135 = vperm.xlu0 %134, %v97
    %v136 = vpop.permute.xlu0 %135
    %v138 = vadd.f32 %v82, %v101
    %v139 = vadd.f32 %v83, %v106
    %v140 = vadd.f32 %v84, %v111
    %v141 = vadd.f32 %v85, %v116
    %v142 = vadd.f32 %v86, %v121
    %v143 = vadd.f32 %v87, %v126
    %v144 = vadd.f32 %v88, %v131
    %v145 = vadd.f32 %v89, %v136
    %v146 = vmax.f32 %v138, 0.0
    %v147 = vmax.f32 %v139, 0.0
    %v148 = vmax.f32 %v140, 0.0
    %v149 = vmax.f32 %v141, 0.0
    %v150 = vmax.f32 %v142, 0.0
    %v151 = vmax.f32 %v143, 0.0
    %v152 = vmax.f32 %v144, 0.0
    %v153 = vmax.f32 %v145, 0.0
    %v154 = vld [vmem:[%s3] sm:$0xf]
    %v155 = vld [vmem:[%s3 + $0x4] sm:$0xf]
    %v156 = vld [vmem:[%s3 + $0x8] sm:$0xf]
    %v157 = vld [vmem:[%s3 + $0xc] sm:$0xf]
    %v158 = vld [vmem:[%s3 + $0x10] sm:$0xf]
    %v159 = vld [vmem:[%s3 + $0x14] sm:$0xf]
    %v160 = vld [vmem:[%s3 + $0x18] sm:$0xf]
    %v161 = vld [vmem:[%s3 + $0x1c] sm:$0xf]
    %v162 = vpack.c.bf16 %v147, %v146
    %v163 = vpack.c.bf16 %v149, %v148
    %v164 = vpack.c.bf16 %v151, %v150
    %v165 = vpack.c.bf16 %v153, %v152
    %v174 = vunpack.c.l.b16 %v154
    %v175 = vunpack.c.l.b16 %v155
    %v176 = vunpack.c.l.b16 %v156
    %v177 = vunpack.c.l.b16 %v157
    %v178 = vunpack.c.l.b16 %v158
    %v179 = vunpack.c.l.b16 %v159
    %v180 = vunpack.c.l.b16 %v160
    %v181 = vunpack.c.l.b16 %v161
    %v182 = vpack.c.b16 %v175, %v174
    %v183 = vpack.c.b16 %v177, %v176
    %v184 = vpack.c.b16 %v179, %v178
    %v185 = vpack.c.b16 %v181, %v180
    %vm186 = vcmask 523264
    %v188 = vsel %vm186, %v182, 0
    %v191 = vsel %vm186, %v183, 0
    %v194 = vsel %vm186, %v184, 0
    %v197 = vsel %vm186, %v185, 0
    %199 = vmatprep.subr.bf16.mxu0 0
    %200 = vmatpush1.bf16.msra.mxu0 0
    %201 = vmatprep.subr.bf16.mxu0 0
    %202 = vmatpush1.bf16.msra.mxu0 0
    %203 = vmatprep.subr.bf16.mxu0 0
    %204 = vmatpush1.bf16.msra.mxu0 0
    %205 = vmatprep.subr.bf16.mxu0 0
    %206 = vmatpush1.bf16.msra.mxu0 0
    %207 = vmatprep.subr.bf16.mxu0 0
    %208 = vmatpush1.bf16.msra.mxu0 %v165
    %209 = vmatprep.subr.bf16.mxu0 0
    %210 = vmatpush1.bf16.msra.mxu0 %v164
    %211 = vmatprep.subr.bf16.mxu0 0
    %212 = vmatpush1.bf16.msra.mxu0 %v163
    %213 = vmatprep.subr.bf16.mxu0 0
    %214 = vmatpush1.bf16.msra.mxu0 %v162
    %215 = vmatprep.subr.bf16.mxu0 0
    %216 = vmatpush2.bf16.msra.mxu0 0
    %217 = vmatprep.subr.bf16.mxu0 0
    %218 = vmatpush2.bf16.msra.mxu0 0
    %219 = vmatprep.subr.bf16.mxu0 0
    %220 = vmatpush2.bf16.msra.mxu0 0
    %221 = vmatprep.subr.bf16.mxu0 0
    %222 = vmatpush2.bf16.msra.mxu0 0
    %223 = vmatprep.subr.bf16.mxu0 0
    %224 = vmatpush2.bf16.msra.mxu0 0
    %225 = vmatprep.subr.bf16.mxu0 0
    %226 = vmatpush2.bf16.msra.mxu0 0
    %227 = vmatprep.subr.bf16.mxu0 0
    %228 = vmatpush2.bf16.msra.mxu0 0
    %229 = vmatprep.subr.bf16.mxu0 0
    %230 = vmatpush2.bf16.msra.mxu0 0
    %231 = vmatprep.mubr.bf16.mxu0 0
    %232 = vmatmul.mubr.bf16.gmra.mxu0 %v188
    %v233 = vpop.f32.mrf.mxu0
    %v234 = vadd.f32 0.0, %v233
    %v235 = vpop.f32.mrf.mxu0
    %v236 = vpop.f32.mrf.mxu0
    %v237 = vadd.f32 0.0, %v236
    %v238 = vpop.f32.mrf.mxu0
    %239 = vmatprep.mubr.bf16.mxu0 0
    %240 = vmatmul.mubr.bf16.gmra.mxu0 %v191
    %v241 = vpop.f32.mrf.mxu0
    %v242 = vadd.f32 0.0, %v241
    %v243 = vpop.f32.mrf.mxu0
    %v244 = vpop.f32.mrf.mxu0
    %v245 = vadd.f32 0.0, %v244
    %v246 = vpop.f32.mrf.mxu0
    %247 = vmatprep.mubr.bf16.mxu0 0
    %248 = vmatmul.mubr.bf16.gmra.mxu0 %v194
    %v249 = vpop.f32.mrf.mxu0
    %v250 = vadd.f32 0.0, %v249
    %v251 = vpop.f32.mrf.mxu0
    %v252 = vpop.f32.mrf.mxu0
    %v253 = vadd.f32 0.0, %v252
    %v254 = vpop.f32.mrf.mxu0
    %255 = vmatprep.mubr.bf16.mxu0 0
    %256 = vmatmul.mubr.bf16.gmra.mxu0 %v197
    %v257 = vpop.f32.mrf.mxu0
    %v258 = vadd.f32 0.0, %v257
    %v259 = vpop.f32.mrf.mxu0
    %v260 = vpop.f32.mrf.mxu0
    %v261 = vadd.f32 0.0, %v260
    %v262 = vpop.f32.mrf.mxu0
    %263 = vdwg.mxu0
    %v264 = vmax.f32 %v234, 0.0
    %v265 = vmax.f32 %v237, 0.0
    %v266 = vmax.f32 %v242, 0.0
    %v267 = vmax.f32 %v245, 0.0
    %v268 = vmax.f32 %v250, 0.0
    %v269 = vmax.f32 %v253, 0.0
    %v270 = vmax.f32 %v258, 0.0
    %v271 = vmax.f32 %v261, 0.0
    %v272 = vld [vmem:[%s4] sm:$0xff]
    %v273 = vld [vmem:[%s4 + $0x8] sm:$0xff]
    %v274 = vld [vmem:[%s4 + $0x10] sm:$0xff]
    %v275 = vld [vmem:[%s4 + $0x18] sm:$0xff]
    %v276 = vld [vmem:[%s4 + $0x20] sm:$0xff]
    %v277 = vld [vmem:[%s4 + $0x28] sm:$0xff]
    %v278 = vld [vmem:[%s4 + $0x30] sm:$0xff]
    %v279 = vld [vmem:[%s4 + $0x38] sm:$0xff]
    %281 = vset.pattern.permute.xlu0 0
    %282 = vperm.xlu0 %281, %v272
    %v283 = vpop.permute.xlu0 %282
    %286 = vset.pattern.permute.xlu0 0
    %287 = vperm.xlu0 %286, %v273
    %v288 = vpop.permute.xlu0 %287
    %291 = vset.pattern.permute.xlu0 0
    %292 = vperm.xlu0 %291, %v274
    %v293 = vpop.permute.xlu0 %292
    %296 = vset.pattern.permute.xlu0 0
    %297 = vperm.xlu0 %296, %v275
    %v298 = vpop.permute.xlu0 %297
    %301 = vset.pattern.permute.xlu0 0
    %302 = vperm.xlu0 %301, %v276
    %v303 = vpop.permute.xlu0 %302
    %306 = vset.pattern.permute.xlu0 0
    %307 = vperm.xlu0 %306, %v277
    %v308 = vpop.permute.xlu0 %307
    %311 = vset.pattern.permute.xlu0 0
    %312 = vperm.xlu0 %311, %v278
    %v313 = vpop.permute.xlu0 %312
    %316 = vset.pattern.permute.xlu0 0
    %317 = vperm.xlu0 %316, %v279
    %v318 = vpop.permute.xlu0 %317
    %v320 = vmul.f32 %v283, %v264
    %v321 = vmul.f32 %v288, %v265
    %v322 = vmul.f32 %v293, %v266
    %v323 = vmul.f32 %v298, %v267
    %v324 = vmul.f32 %v303, %v268
    %v325 = vmul.f32 %v308, %v269
    %v326 = vmul.f32 %v313, %v270
    %v327 = vmul.f32 %v318, %v271
    %v328 = vadd.f32 %v320, %v321
    %v329 = vadd.f32 %v328, %v322
    %v330 = vadd.f32 %v329, %v323
    %v331 = vadd.f32 %v330, %v324
    %v332 = vadd.f32 %v331, %v325
    %v333 = vadd.f32 %v332, %v326
    %v334 = vadd.f32 %v333, %v327
    %v335 = vrot.slane %v334, 4
    %v336 = vadd.f32 %v334, %v335
    %v337 = vrot.slane %v336, 2
    %v338 = vadd.f32 %v336, %v337
    %v339 = vrot.slane %v338, 1
    %v340 = vadd.f32 %v338, %v339
    %v341 = vld [vmem:[#allocation2] sm:$0x1]
    %343 = vset.pattern.permute.xlu0 0
    %344 = vperm.xlu0 %343, %v341
    %v345 = vpop.permute.xlu0 %344
    %v347 = vlaneseq
    %v348 = vshrl.u32 %v347, 7
    %v349 = vsub.s32 0, %v348
    %v350 = vrot.slane %v345, %v349
    %v351 = vadd.f32 %v340, %v350
    %352 = vst [vmem:[#allocation3] sm:$0x1] %v351
    // Predicated region
    $region26: #{tpu_custom_call.1} parent=1 // pred_check
      _
    $region27: #{tpu_custom_call.1} parent=1 // pred_check_branch
      %354 = sbr.rel (0) target = $region29
    $region28: #{tpu_custom_call.1} parent=1 // pred_region
      %s356 = ssub.s32 16, 16
      %357 = vsyncadd [#allocation4], %s356
      %s359 = sshll.u32 [#allocation3], 4
      %s360 = int_to_ptr.vmem [resolvable:$true] %s359
      %362 = dma.vmem_to_hbm [thread:$0]  %s360, 16, %s6, [#allocation4]
    $region29: #{tpu_custom_call.1} parent=1 // pred_fallthru
      _
    // Predicated region
    $region30: #{tpu_custom_call.1} parent=1 // pred_check
      _
    $region31: #{tpu_custom_call.1} parent=1 // pred_check_branch
      %364 = sbr.rel (0) target = $region33
    $region32: #{tpu_custom_call.1} parent=1 // pred_region
      %365 = dma.done [#allocation4], 16
    $region33: #{tpu_custom_call.1} parent=1 // pred_fallthru
      _
    %366 = vsyncpa [#allocation4], 1

</llo_original>
